<compile_context>
chip_gen: v7x
topology: tpu7x:2x2x1
jax: 0.10.0
libtpu: 0.0.40
codegen_flags: <defaults>
</compile_context>

<pallas_src>
import functools

import jax
import jax.numpy as jnp
from jax.experimental import pallas as pl
from jax.experimental.pallas import tpu as pltpu

# Pendulum-v1: state_dim = 3, action_dim = 1, hidden_dim = 64
STATE_DIM = 3
ACTION_DIM = 1
HIDDEN_DIM = 64

FEAT_PAD = 8                       # input features padded to one sublane tile
HIDDEN_PAD = 128                   # hidden padded to a full 128-lane vreg tile
ONE_FEAT = STATE_DIM + ACTION_DIM  # input lane 4: constant 1 (carries b1)
ONE_UNIT = HIDDEN_DIM              # hidden unit 64: pinned to 1 (carries b2, b3)
BATCH = 2


def qvalue_kernel(xa_ref, w1t_ref, slab_ref, out_ref):
    """One (8, TM) batch tile; all parameters VMEM-resident across grid steps."""
    # Layer 1: (128, 8) @ (8, TM) -> (128, TM); bias folded via constant-1 row.
    h1 = jnp.maximum(
        jnp.dot(w1t_ref[...], xa_ref[...], preferred_element_type=jnp.float32),
        0.0)
    # Layer 2: (128, 128) @ (128, TM) -> (128, TM); bias via always-1 unit 64.
    h2 = jnp.maximum(
        jnp.dot(slab_ref[0:HIDDEN_PAD, :], h1,
                preferred_element_type=jnp.float32),
        0.0)
    # Output layer: (1, 128) @ (128, TM) -> (1, TM); fc_out bias via unit 64.
    q = jnp.dot(slab_ref[HIDDEN_PAD:HIDDEN_PAD + 1, :], h2,
                preferred_element_type=jnp.float32)
    out_ref[...] = q.astype(out_ref.dtype)


def _round_up(n, m):
    return ((n + m - 1) // m) * m


def _cdiv(a, b):
    return (a + b - 1) // b


def init_params(key, state_dim, hidden_dim, action_dim):
    """torch.nn.Linear-style init U(-1/sqrt(fan_in), 1/sqrt(fan_in)).

    Logical (unpadded) weights stored as (in_features, out_features)."""
    def linear(key, fan_in, fan_out):
        kw, kb = jax.random.split(key)
        bound = 1.0 / jnp.sqrt(jnp.float32(fan_in))
        w = jax.random.uniform(kw, (fan_in, fan_out), jnp.float32, -bound, bound)
        b = jax.random.uniform(kb, (1, fan_out), jnp.float32, -bound, bound)
        return w, b

    k1, k2, k3 = jax.random.split(key, 3)
    w1, b1 = linear(k1, state_dim + action_dim, hidden_dim)
    w2, b2 = linear(k2, hidden_dim, hidden_dim)
    w3, b3 = linear(k3, hidden_dim, 1)
    return (w1, b1, w2, b2, w3, b3)


def prepare_params(params):
    """Kernel-side parameter layout (exact):

      * hidden zero-padded 64 -> 128 lanes,
      * concat folded (merged W1 over the 8 padded input features),
      * b1 folded into W1 row ONE_FEAT (input feature that is constant 1),
      * b2 / fc_out bias folded via hidden unit ONE_UNIT pinned to 1,
      * weights stored transposed for the batch-on-lanes layout,
      * W2^T and the fc_out row packed into one (129, 128) slab.
    """
    w1, b1, w2, b2, w3, b3 = params
    S, A, H = STATE_DIM, ACTION_DIM, HIDDEN_DIM

    # Layer 1, merged + bias-folded: (8, 128), then transposed to (128, 8).
    w1m = jnp.zeros((FEAT_PAD, HIDDEN_PAD), jnp.float32)
    w1m = w1m.at[:S + A, :H].set(w1)          # state + action columns of fc1
    w1m = w1m.at[ONE_FEAT, :H].set(b1[0])     # constant-1 feature carries b1
    w1m = w1m.at[ONE_FEAT, ONE_UNIT].set(1.0) # hidden unit 64 := ReLU(1) = 1
    w1t = w1m.T                                # (128, 8)

    # Layer 2, bias-folded: (128, 128), transposed.
    w2m = jnp.zeros((HIDDEN_PAD, HIDDEN_PAD), jnp.float32)
    w2m = w2m.at[:H, :H].set(w2)
    w2m = w2m.at[ONE_UNIT, :H].set(b2[0])      # unit 64 (==1) carries b2
    w2m = w2m.at[ONE_UNIT, ONE_UNIT].set(1.0)  # keep unit 64 == 1 after layer 2
    w2t = w2m.T                                # (128, 128)

    # Output row: (1, 128); fc_out bias folded via unit 64.
    w3row = jnp.zeros((1, HIDDEN_PAD), jnp.float32)
    w3row = w3row.at[0, :H].set(w3[:, 0])
    w3row = w3row.at[0, ONE_UNIT].set(b3[0, 0])

    slab = jnp.concatenate([w2t, w3row], axis=0)   # (129, 128) parameter slab
    return (w1t, slab)


@functools.partial(jax.jit, static_argnames=("tile_m", "min_tiles"))
def qvalue_forward(x, a, kparams, *, tile_m=1024, min_tiles=2):
    """x: (B, state_dim), a: (B, action_dim) -> (B, 1)"""
    if tile_m % 128 != 0:
        raise ValueError("tile_m must be a multiple of 128 (lane-dense output).")
    w1t, slab = kparams
    B = x.shape[0]

    # Batch-on-lanes input: (8, B_pad); lane layout [x | a | 1 | 0, 0, 0].
    n_zero = FEAT_PAD - STATE_DIM - ACTION_DIM - 1
    feats = jnp.concatenate(
        [x, a, jnp.ones((B, 1), x.dtype), jnp.zeros((B, n_zero), x.dtype)],
        axis=1)                                              # (B, 8)

    # Tile selection: big tiles to amortize per-step overhead, >= 2 tiles when
    # the batch allows it (v7x megacore), minimal padded rows, TM % 128 == 0.
    b128 = _round_up(B, 128)
    nt = _cdiv(b128, tile_m)
    if min_tiles > 1 and b128 >= min_tiles * 128:
        nt = max(nt, min_tiles)
    tm = _round_up(_cdiv(b128, nt), 128)
    nt = _cdiv(b128, tm)
    b_pad = nt * tm

    feats = jnp.pad(feats, ((0, b_pad - B), (0, 0)))
    xa_t = feats.T                                           # (8, B_pad)

    out = pl.pallas_call(
        qvalue_kernel,
        grid=(nt,),
        out_shape=jax.ShapeDtypeStruct((1, b_pad), jnp.float32),
        in_specs=[
            pl.BlockSpec((FEAT_PAD, tm), lambda i: (0, i)),   # batch tile
            pl.BlockSpec(w1t.shape, lambda i: (0, 0)),        # resident W1^T
            pl.BlockSpec(slab.shape, lambda i: (0, 0)),       # resident W2^T|w3
        ],
        out_specs=pl.BlockSpec((1, tm), lambda i: (0, i)),    # lane-dense q row
        compiler_params=pltpu.CompilerParams(
            dimension_semantics=("parallel",)),
    )(xa_t, w1t, slab)

    # (1, B_pad) -> (B, 1); row-major reshape preserves sample order.
    return out.reshape(b_pad, 1)[:B]


def reference_forward(x, a, params):
    """Pure-JAX reference (logical, unpadded params)."""
    w1, b1, w2, b2, w3, b3 = params
    cat = jnp.concatenate([x, a], axis=1)
    h1 = jax.nn.relu(cat @ w1 + b1)
    h2 = jax.nn.relu(h1 @ w2 + b2)
    return h2 @ w3 + b3


if __name__ == "__main__":
    key = jax.random.PRNGKey(0)
    kx, ka, kp = jax.random.split(key, 3)

    params = init_params(kp, STATE_DIM, HIDDEN_DIM, ACTION_DIM)
    kparams = prepare_params(params)

    # Nominal small-batch check (module's original shapes).
    x = jax.random.normal(kx, (BATCH, STATE_DIM), jnp.float32)
    a = jax.random.normal(ka, (BATCH, ACTION_DIM), jnp.float32)
    q = jax.block_until_ready(qvalue_forward(x, a, kparams))
    q_ref = reference_forward(x, a, params)
    assert q.shape == (BATCH, 1)
    assert jnp.allclose(q, q_ref, atol=1e-4, rtol=1e-4), (q, q_ref)

    # Larger batch exercising the multi-tile parallel grid + row padding.
    kx2, ka2 = jax.random.split(jax.random.PRNGKey(1))
    B2 = 600
    x2 = jax.random.normal(kx2, (B2, STATE_DIM), jnp.float32)
    a2 = jax.random.normal(ka2, (B2, ACTION_DIM), jnp.float32)
    q2 = jax.block_until_ready(qvalue_forward(x2, a2, kparams))
    q2_ref = reference_forward(x2, a2, params)
    assert q2.shape == (B2, 1)
    assert jnp.allclose(q2, q2_ref, atol=1e-4, rtol=1e-4)

    print("KERNEL_OK")
</pallas_src>

<mosaic_0001>
module attributes {stable_mosaic.version = 11 : i64} {
  func.func @qvalue_kernel(%arg0: i32, %arg1: memref<8x128xf32, #tpu.memory_space<vmem>>, %arg2: memref<128x8xf32, #tpu.memory_space<vmem>>, %arg3: memref<129x128xf32, #tpu.memory_space<vmem>>, %arg4: memref<1x128xf32, #tpu.memory_space<vmem>>) attributes {dimension_semantics = [#tpu.dimension_semantics<parallel>], iteration_bounds = array<i64: 1>, scalar_prefetch = 0 : i64, scratch_operands = 0 : i64, tpu.core_type = #tpu.core_type<tc>, window_params = [{transform_indices = @transform_0, window_bounds = array<i64: 8, 128>}, {pipeline_mode = #tpu.pipeline_mode<synchronous>, transform_indices = @transform_1, window_bounds = array<i64: 128, 8>}, {pipeline_mode = #tpu.pipeline_mode<synchronous>, transform_indices = @transform_2, window_bounds = array<i64: 129, 128>}, {transform_indices = @transform_3, window_bounds = array<i64: 1, 128>}]} {
    %c0 = arith.constant 0 : index
    %c0_0 = arith.constant 0 : index
    %0 = vector.load %arg2[%c0, %c0_0] : memref<128x8xf32, #tpu.memory_space<vmem>>, vector<128x8xf32>
    %c0_1 = arith.constant 0 : index
    %c0_2 = arith.constant 0 : index
    %1 = vector.load %arg1[%c0_1, %c0_2] : memref<8x128xf32, #tpu.memory_space<vmem>>, vector<8x128xf32>
    %cst = arith.constant dense<0.000000e+00> : vector<128x128xf32>
    %2 = tpu.matmul %0, %1, %cst {dimension_numbers = #tpu.dot_dimension_numbers<[1], [0], [0], [1], [0, 0, 1, 1], [], []>} : vector<128x8xf32>, vector<8x128xf32>, vector<128x128xf32> -> vector<128x128xf32>
    %cst_3 = arith.constant 0.000000e+00 : f32
    %3 = vector.broadcast %cst_3 : f32 to vector<128x128xf32>
    %4 = arith.maximumf %2, %3 : vector<128x128xf32>
    %c0_4 = arith.constant 0 : index
    %c0_5 = arith.constant 0 : index
    %5 = vector.load %arg3[%c0_4, %c0_5] : memref<129x128xf32, #tpu.memory_space<vmem>>, vector<128x128xf32>
    %cst_6 = arith.constant dense<0.000000e+00> : vector<128x128xf32>
    %6 = tpu.matmul %5, %4, %cst_6 {dimension_numbers = #tpu.dot_dimension_numbers<[1], [0], [0], [1], [0, 0, 1, 1], [], []>} : vector<128x128xf32>, vector<128x128xf32>, vector<128x128xf32> -> vector<128x128xf32>
    %cst_7 = arith.constant 0.000000e+00 : f32
    %7 = vector.broadcast %cst_7 : f32 to vector<128x128xf32>
    %8 = arith.maximumf %6, %7 : vector<128x128xf32>
    %c128 = arith.constant 128 : index
    %c0_8 = arith.constant 0 : index
    %9 = vector.load %arg3[%c128, %c0_8] : memref<129x128xf32, #tpu.memory_space<vmem>>, vector<1x128xf32>
    %cst_9 = arith.constant dense<0.000000e+00> : vector<1x128xf32>
    %10 = tpu.matmul %9, %8, %cst_9 {dimension_numbers = #tpu.dot_dimension_numbers<[1], [0], [0], [1], [0, 0, 1, 1], [], []>} : vector<1x128xf32>, vector<128x128xf32>, vector<1x128xf32> -> vector<1x128xf32>
    %c0_10 = arith.constant 0 : index
    %c0_11 = arith.constant 0 : index
    %11 = vector.load %arg4[%c0_10, %c0_11] : memref<1x128xf32, #tpu.memory_space<vmem>>, vector<1x128xf32>
    tpu.vector_store %arg4[%c0_10, %c0_11], %10 {strides = array<i32>} : memref<1x128xf32, #tpu.memory_space<vmem>>, vector<1x128xf32>,
    return
  }
  func.func @transform_0(%arg0: i32) -> (i32, i32) {
    %c0_i32 = arith.constant 0 : i32
    %c0_i32_0 = arith.constant 0 : i32
    return %c0_i32, %arg0 : i32, i32
  }
  func.func @transform_1(%arg0: i32) -> (i32, i32) {
    %c0_i32 = arith.constant 0 : i32
    %c0_i32_0 = arith.constant 0 : i32
    %c0_i32_1 = arith.constant 0 : i32
    return %c0_i32, %c0_i32_0 : i32, i32
  }
  func.func @transform_2(%arg0: i32) -> (i32, i32) {
    %c0_i32 = arith.constant 0 : i32
    %c0_i32_0 = arith.constant 0 : i32
    %c0_i32_1 = arith.constant 0 : i32
    return %c0_i32, %c0_i32_0 : i32, i32
  }
  func.func @transform_3(%arg0: i32) -> (i32, i32) {
    %c0_i32 = arith.constant 0 : i32
    %c0_i32_0 = arith.constant 0 : i32
    return %c0_i32, %arg0 : i32, i32
  }
}

</mosaic_0001>

<llo_original>
// kernel: qvalue_forward.1
$region0: #{qvalue_forward.1}
  #allocation0 [shape = 'u32[]', space=smem, size = 0x4, offset = 0x4, fixed_abs, tag = 'smem constant byte address 0x4 - core index']
  #allocation1 [shape = 'u32[144,128]{1,0:T(1,128)}', space=vmem, size = 0x12000, scoped, tag = 'internal scratch']
  %s0 = inlined_call_operand.vmem [shape: f32[8,128], index: 0, kind: input, shape index: {}]
  %s1 = inlined_call_operand.vmem [shape: f32[128,8], index: 1, kind: input, shape index: {}]
  %s2 = inlined_call_operand.vmem [shape: f32[129,128], index: 2, kind: input, shape index: {}]
  %s3 = inlined_call_operand.vmem [shape: f32[1,128], index: 3, kind: output, shape index: {}]
  %s4 = sld [smem:[#allocation0]]
  $region22: #{qvalue_forward.1} parent=0
    _
  %s6 = ssub.s32 1, %s4
  %s7 = scalar_select 0, %s6, %s4
  // Predicated region
  $region2: #{qvalue_forward.1} parent=0 // pred_check
    _
  $region3: #{qvalue_forward.1} parent=0 // pred_check_branch
    %9 = sbr.rel (0) target = $region5
  $region4: #{qvalue_forward.1} parent=0 // pred_region
    _
  $region5: #{qvalue_forward.1} parent=0 // pred_fallthru
    _
  // Predicated region
  $region6: #{qvalue_forward.1} parent=0 // pred_check
    _
  $region7: #{qvalue_forward.1} parent=0 // pred_check_branch
    %11 = sbr.rel (0) target = $region9
  $region8: #{qvalue_forward.1} parent=0 // pred_region
    _
  $region9: #{qvalue_forward.1} parent=0 // pred_fallthru
    _
  // Predicated region
  $region10: #{qvalue_forward.1} parent=0 // pred_check
    _
  $region11: #{qvalue_forward.1} parent=0 // pred_check_branch
    %13 = sbr.rel (0) target = $region13
  $region12: #{qvalue_forward.1} parent=0 // pred_region
    _
  $region13: #{qvalue_forward.1} parent=0 // pred_fallthru
    _
  %v14 = vld [vmem:[%s1] sm:$0xff]
  %v15 = vld [vmem:[%s1 + $0x8] sm:$0xff]
  %v16 = vld [vmem:[%s1 + $0x10] sm:$0xff]
  %v17 = vld [vmem:[%s1 + $0x18] sm:$0xff]
  %v18 = vld [vmem:[%s1 + $0x20] sm:$0xff]
  %v19 = vld [vmem:[%s1 + $0x28] sm:$0xff]
  %v20 = vld [vmem:[%s1 + $0x30] sm:$0xff]
  %v21 = vld [vmem:[%s1 + $0x38] sm:$0xff]
  %v22 = vld [vmem:[%s1 + $0x40] sm:$0xff]
  %v23 = vld [vmem:[%s1 + $0x48] sm:$0xff]
  %v24 = vld [vmem:[%s1 + $0x50] sm:$0xff]
  %v25 = vld [vmem:[%s1 + $0x58] sm:$0xff]
  %v26 = vld [vmem:[%s1 + $0x60] sm:$0xff]
  %v27 = vld [vmem:[%s1 + $0x68] sm:$0xff]
  %v28 = vld [vmem:[%s1 + $0x70] sm:$0xff]
  %v29 = vld [vmem:[%s1 + $0x78] sm:$0xff]
  %v30 = vld [vmem:[%s0] sm:$0xff]
  %vm31 = vcmask 64512
  %v33 = vsel %vm31, %v14, 0
  %v36 = vsel %vm31, %v15, 0
  %v39 = vsel %vm31, %v16, 0
  %v42 = vsel %vm31, %v17, 0
  %v45 = vsel %vm31, %v18, 0
  %v48 = vsel %vm31, %v19, 0
  %v51 = vsel %vm31, %v20, 0
  %v54 = vsel %vm31, %v21, 0
  %v57 = vsel %vm31, %v22, 0
  %v60 = vsel %vm31, %v23, 0
  %v63 = vsel %vm31, %v24, 0
  %v66 = vsel %vm31, %v25, 0
  %v69 = vsel %vm31, %v26, 0
  %v72 = vsel %vm31, %v27, 0
  %v75 = vsel %vm31, %v28, 0
  %v78 = vsel %vm31, %v29, 0
  %80 = vmatprep.subr.mxu0 0.0
  %81 = vmatpush1.msra.mxu0 %v30
  %82 = vmatprep.subr.mxu0 0.0
  %83 = vmatpush1.msra.mxu0 0.0
  %84 = vmatprep.subr.mxu0 0.0
  %85 = vmatpush1.msra.mxu0 0.0
  %86 = vmatprep.subr.mxu0 0.0
  %87 = vmatpush1.msra.mxu0 0.0
  %88 = vmatprep.subr.mxu0 0.0
  %89 = vmatpush1.msra.mxu0 0.0
  %90 = vmatprep.subr.mxu0 0.0
  %91 = vmatpush1.msra.mxu0 0.0
  %92 = vmatprep.subr.mxu0 0.0
  %93 = vmatpush1.msra.mxu0 0.0
  %94 = vmatprep.subr.mxu0 0.0
  %95 = vmatpush1.msra.mxu0 0.0
  %96 = vmatprep.subr.mxu0 0.0
  %97 = vmatpush1.msra.mxu0 0.0
  %98 = vmatprep.subr.mxu0 0.0
  %99 = vmatpush1.msra.mxu0 0.0
  %100 = vmatprep.subr.mxu0 0.0
  %101 = vmatpush1.msra.mxu0 0.0
  %102 = vmatprep.subr.mxu0 0.0
  %103 = vmatpush1.msra.mxu0 0.0
  %104 = vmatprep.subr.mxu0 0.0
  %105 = vmatpush1.msra.mxu0 0.0
  %106 = vmatprep.subr.mxu0 0.0
  %107 = vmatpush1.msra.mxu0 0.0
  %108 = vmatprep.subr.mxu0 0.0
  %109 = vmatpush1.msra.mxu0 0.0
  %110 = vmatprep.subr.mxu0 0.0
  %111 = vmatpush1.msra.mxu0 0.0
  %112 = vmatprep.subr.mxu0 0.0
  %113 = vmatpush1.msra.mxu0 0.0
  %114 = vmatprep.subr.mxu0 0.0
  %115 = vmatpush1.msra.mxu0 0.0
  %116 = vmatprep.subr.mxu0 0.0
  %117 = vmatpush1.msra.mxu0 0.0
  %118 = vmatprep.subr.mxu0 0.0
  %119 = vmatpush1.msra.mxu0 0.0
  %120 = vmatprep.subr.mxu0 0.0
  %121 = vmatpush1.msra.mxu0 0.0
  %122 = vmatprep.subr.mxu0 0.0
  %123 = vmatpush1.msra.mxu0 0.0
  %124 = vmatprep.subr.mxu0 0.0
  %125 = vmatpush1.msra.mxu0 0.0
  %126 = vmatprep.subr.mxu0 0.0
  %127 = vmatpush1.msra.mxu0 0.0
  %128 = vmatprep.subr.mxu0 0.0
  %129 = vmatpush1.msra.mxu0 0.0
  %130 = vmatprep.subr.mxu0 0.0
  %131 = vmatpush1.msra.mxu0 0.0
  %132 = vmatprep.subr.mxu0 0.0
  %133 = vmatpush1.msra.mxu0 0.0
  %134 = vmatprep.subr.mxu0 0.0
  %135 = vmatpush1.msra.mxu0 0.0
  %136 = vmatprep.subr.mxu0 0.0
  %137 = vmatpush1.msra.mxu0 0.0
  %138 = vmatprep.subr.mxu0 0.0
  %139 = vmatpush1.msra.mxu0 0.0
  %140 = vmatprep.subr.mxu0 0.0
  %141 = vmatpush1.msra.mxu0 0.0
  %142 = vmatprep.subr.mxu0 0.0
  %143 = vmatpush1.msra.mxu0 0.0
  %144 = vmatprep.mubr.f32.mxu0 0.0
  %145 = vmatmul.mubr.f32.gmra.mrb[0].mxu0 %v33
  %v146 = vpop.f32.mrb[0].mxu0
  %v147 = vadd.f32 0.0, %v146
  %v148 = vpop.f32.mrb[0].mxu0
  %149 = vmatprep.mubr.f32.mxu0 0.0
  %150 = vmatmul.mubr.f32.gmra.mrb[0].mxu0 %v36
  %v151 = vpop.f32.mrb[0].mxu0
  %v152 = vadd.f32 0.0, %v151
  %v153 = vpop.f32.mrb[0].mxu0
  %154 = vmatprep.mubr.f32.mxu0 0.0
  %155 = vmatmul.mubr.f32.gmra.mrb[0].mxu0 %v39
  %v156 = vpop.f32.mrb[0].mxu0
  %v157 = vadd.f32 0.0, %v156
  %v158 = vpop.f32.mrb[0].mxu0
  %159 = vmatprep.mubr.f32.mxu0 0.0
  %160 = vmatmul.mubr.f32.gmra.mrb[0].mxu0 %v42
  %v161 = vpop.f32.mrb[0].mxu0
  %v162 = vadd.f32 0.0, %v161
  %v163 = vpop.f32.mrb[0].mxu0
  %164 = vmatprep.mubr.f32.mxu0 0.0
  %165 = vmatmul.mubr.f32.gmra.mrb[0].mxu0 %v45
  %v166 = vpop.f32.mrb[0].mxu0
  %v167 = vadd.f32 0.0, %v166
  %v168 = vpop.f32.mrb[0].mxu0
  %169 = vmatprep.mubr.f32.mxu0 0.0
  %170 = vmatmul.mubr.f32.gmra.mrb[0].mxu0 %v48
  %v171 = vpop.f32.mrb[0].mxu0
  %v172 = vadd.f32 0.0, %v171
  %v173 = vpop.f32.mrb[0].mxu0
  %174 = vmatprep.mubr.f32.mxu0 0.0
  %175 = vmatmul.mubr.f32.gmra.mrb[0].mxu0 %v51
  %v176 = vpop.f32.mrb[0].mxu0
  %v177 = vadd.f32 0.0, %v176
  %v178 = vpop.f32.mrb[0].mxu0
  %179 = vmatprep.mubr.f32.mxu0 0.0
  %180 = vmatmul.mubr.f32.gmra.mrb[0].mxu0 %v54
  %v181 = vpop.f32.mrb[0].mxu0
  %v182 = vadd.f32 0.0, %v181
  %v183 = vpop.f32.mrb[0].mxu0
  %184 = vmatprep.mubr.f32.mxu0 0.0
  %185 = vmatmul.mubr.f32.gmra.mrb[0].mxu0 %v57
  %v186 = vpop.f32.mrb[0].mxu0
  %v187 = vadd.f32 0.0, %v186
  %v188 = vpop.f32.mrb[0].mxu0
  %189 = vmatprep.mubr.f32.mxu0 0.0
  %190 = vmatmul.mubr.f32.gmra.mrb[0].mxu0 %v60
  %v191 = vpop.f32.mrb[0].mxu0
  %v192 = vadd.f32 0.0, %v191
  %v193 = vpop.f32.mrb[0].mxu0
  %194 = vmatprep.mubr.f32.mxu0 0.0
  %195 = vmatmul.mubr.f32.gmra.mrb[0].mxu0 %v63
  %v196 = vpop.f32.mrb[0].mxu0
  %v197 = vadd.f32 0.0, %v196
  %v198 = vpop.f32.mrb[0].mxu0
  %199 = vmatprep.mubr.f32.mxu0 0.0
  %200 = vmatmul.mubr.f32.gmra.mrb[0].mxu0 %v66
  %v201 = vpop.f32.mrb[0].mxu0
  %v202 = vadd.f32 0.0, %v201
  %v203 = vpop.f32.mrb[0].mxu0
  %204 = vmatprep.mubr.f32.mxu0 0.0
  %205 = vmatmul.mubr.f32.gmra.mrb[0].mxu0 %v69
  %v206 = vpop.f32.mrb[0].mxu0
  %v207 = vadd.f32 0.0, %v206
  %v208 = vpop.f32.mrb[0].mxu0
  %209 = vmatprep.mubr.f32.mxu0 0.0
  %210 = vmatmul.mubr.f32.gmra.mrb[0].mxu0 %v72
  %v211 = vpop.f32.mrb[0].mxu0
  %v212 = vadd.f32 0.0, %v211
  %v213 = vpop.f32.mrb[0].mxu0
  %214 = vmatprep.mubr.f32.mxu0 0.0
  %215 = vmatmul.mubr.f32.gmra.mrb[0].mxu0 %v75
  %v216 = vpop.f32.mrb[0].mxu0
  %v217 = vadd.f32 0.0, %v216
  %v218 = vpop.f32.mrb[0].mxu0
  %219 = vmatprep.mubr.f32.mxu0 0.0
  %220 = vmatmul.mubr.f32.gmra.mrb[0].mxu0 %v78
  %v221 = vpop.f32.mrb[0].mxu0
  %v222 = vadd.f32 0.0, %v221
  %v223 = vpop.f32.mrb[0].mxu0
  %224 = vdwg.mxu0
  %v225 = vmax.f32 %v147, 0.0
  %v226 = vmax.f32 %v152, 0.0
  %v227 = vmax.f32 %v157, 0.0
  %v228 = vmax.f32 %v162, 0.0
  %v229 = vmax.f32 %v167, 0.0
  %v230 = vmax.f32 %v172, 0.0
  %v231 = vmax.f32 %v177, 0.0
  %v232 = vmax.f32 %v182, 0.0
  %v233 = vmax.f32 %v187, 0.0
  %v234 = vmax.f32 %v192, 0.0
  %v235 = vmax.f32 %v197, 0.0
  %v236 = vmax.f32 %v202, 0.0
  %v237 = vmax.f32 %v207, 0.0
  %v238 = vmax.f32 %v212, 0.0
  %v239 = vmax.f32 %v217, 0.0
  %v240 = vmax.f32 %v222, 0.0
  %v241 = vld [vmem:[%s2] sm:$0xff]
  %v242 = vld [vmem:[%s2 + $0x8] sm:$0xff]
  %v243 = vld [vmem:[%s2 + $0x10] sm:$0xff]
  %v244 = vld [vmem:[%s2 + $0x18] sm:$0xff]
  %v245 = vld [vmem:[%s2 + $0x20] sm:$0xff]
  %v246 = vld [vmem:[%s2 + $0x28] sm:$0xff]
  %v247 = vld [vmem:[%s2 + $0x30] sm:$0xff]
  %v248 = vld [vmem:[%s2 + $0x38] sm:$0xff]
  %v249 = vld [vmem:[%s2 + $0x40] sm:$0xff]
  %v250 = vld [vmem:[%s2 + $0x48] sm:$0xff]
  %v251 = vld [vmem:[%s2 + $0x50] sm:$0xff]
  %v252 = vld [vmem:[%s2 + $0x58] sm:$0xff]
  %v253 = vld [vmem:[%s2 + $0x60] sm:$0xff]
  %v254 = vld [vmem:[%s2 + $0x68] sm:$0xff]
  %v255 = vld [vmem:[%s2 + $0x70] sm:$0xff]
  %v256 = vld [vmem:[%s2 + $0x78] sm:$0xff]
  %257 = vmatprep.subr.mxu0 0.0
  %258 = vmatpush1.msra.mxu0 %v225
  %259 = vmatprep.subr.mxu0 0.0
  %260 = vmatpush1.msra.mxu0 %v226
  %261 = vmatprep.subr.mxu0 0.0
  %262 = vmatpush1.msra.mxu0 %v227
  %263 = vmatprep.subr.mxu0 0.0
  %264 = vmatpush1.msra.mxu0 %v228
  %265 = vmatprep.subr.mxu0 0.0
  %266 = vmatpush1.msra.mxu0 %v229
  %267 = vmatprep.subr.mxu0 0.0
  %268 = vmatpush1.msra.mxu0 %v230
  %269 = vmatprep.subr.mxu0 0.0
  %270 = vmatpush1.msra.mxu0 %v231
  %271 = vmatprep.subr.mxu0 0.0
  %272 = vmatpush1.msra.mxu0 %v232
  %273 = vmatprep.subr.mxu0 0.0
  %274 = vmatpush1.msra.mxu0 %v233
  %275 = vmatprep.subr.mxu0 0.0
  %276 = vmatpush1.msra.mxu0 %v234
  %277 = vmatprep.subr.mxu0 0.0
  %278 = vmatpush1.msra.mxu0 %v235
  %279 = vmatprep.subr.mxu0 0.0
  %280 = vmatpush1.msra.mxu0 %v236
  %281 = vmatprep.subr.mxu0 0.0
  %282 = vmatpush1.msra.mxu0 %v237
  %283 = vmatprep.subr.mxu0 0.0
  %284 = vmatpush1.msra.mxu0 %v238
  %285 = vmatprep.subr.mxu0 0.0
  %286 = vmatpush1.msra.mxu0 %v239
  %287 = vmatprep.subr.mxu0 0.0
  %288 = vmatpush1.msra.mxu0 %v240
  %289 = vmatprep.subr.mxu0 0.0
  %290 = vmatpush1.msra.mxu0 0.0
  %291 = vmatprep.subr.mxu0 0.0
  %292 = vmatpush1.msra.mxu0 0.0
  %293 = vmatprep.subr.mxu0 0.0
  %294 = vmatpush1.msra.mxu0 0.0
  %295 = vmatprep.subr.mxu0 0.0
  %296 = vmatpush1.msra.mxu0 0.0
  %297 = vmatprep.subr.mxu0 0.0
  %298 = vmatpush1.msra.mxu0 0.0
  %299 = vmatprep.subr.mxu0 0.0
  %300 = vmatpush1.msra.mxu0 0.0
  %301 = vmatprep.subr.mxu0 0.0
  %302 = vmatpush1.msra.mxu0 0.0
  %303 = vmatprep.subr.mxu0 0.0
  %304 = vmatpush1.msra.mxu0 0.0
  %305 = vmatprep.subr.mxu0 0.0
  %306 = vmatpush1.msra.mxu0 0.0
  %307 = vmatprep.subr.mxu0 0.0
  %308 = vmatpush1.msra.mxu0 0.0
  %309 = vmatprep.subr.mxu0 0.0
  %310 = vmatpush1.msra.mxu0 0.0
  %311 = vmatprep.subr.mxu0 0.0
  %312 = vmatpush1.msra.mxu0 0.0
  %313 = vmatprep.subr.mxu0 0.0
  %314 = vmatpush1.msra.mxu0 0.0
  %315 = vmatprep.subr.mxu0 0.0
  %316 = vmatpush1.msra.mxu0 0.0
  %317 = vmatprep.subr.mxu0 0.0
  %318 = vmatpush1.msra.mxu0 0.0
  %319 = vmatprep.subr.mxu0 0.0
  %320 = vmatpush1.msra.mxu0 0.0
  %321 = vmatprep.mubr.f32.mxu0 0.0
  %322 = vmatmul.mubr.f32.gmra.mrb[0].mxu0 %v241
  %v323 = vpop.f32.mrb[0].mxu0
  %v324 = vadd.f32 0.0, %v323
  %v325 = vpop.f32.mrb[0].mxu0
  %326 = vmatprep.mubr.f32.mxu0 0.0
  %327 = vmatmul.mubr.f32.gmra.mrb[0].mxu0 %v242
  %v328 = vpop.f32.mrb[0].mxu0
  %v329 = vadd.f32 0.0, %v328
  %v330 = vpop.f32.mrb[0].mxu0
  %331 = vmatprep.mubr.f32.mxu0 0.0
  %332 = vmatmul.mubr.f32.gmra.mrb[0].mxu0 %v243
  %v333 = vpop.f32.mrb[0].mxu0
  %v334 = vadd.f32 0.0, %v333
  %v335 = vpop.f32.mrb[0].mxu0
  %336 = vmatprep.mubr.f32.mxu0 0.0
  %337 = vmatmul.mubr.f32.gmra.mrb[0].mxu0 %v244
  %v338 = vpop.f32.mrb[0].mxu0
  %v339 = vadd.f32 0.0, %v338
  %v340 = vpop.f32.mrb[0].mxu0
  %341 = vmatprep.mubr.f32.mxu0 0.0
  %342 = vmatmul.mubr.f32.gmra.mrb[0].mxu0 %v245
  %v343 = vpop.f32.mrb[0].mxu0
  %v344 = vadd.f32 0.0, %v343
  %v345 = vpop.f32.mrb[0].mxu0
  %346 = vmatprep.mubr.f32.mxu0 0.0
  %347 = vmatmul.mubr.f32.gmra.mrb[0].mxu0 %v246
  %v348 = vpop.f32.mrb[0].mxu0
  %v349 = vadd.f32 0.0, %v348
  %v350 = vpop.f32.mrb[0].mxu0
  %351 = vmatprep.mubr.f32.mxu0 0.0
  %352 = vmatmul.mubr.f32.gmra.mrb[0].mxu0 %v247
  %v353 = vpop.f32.mrb[0].mxu0
  %v354 = vadd.f32 0.0, %v353
  %v355 = vpop.f32.mrb[0].mxu0
  %356 = vmatprep.mubr.f32.mxu0 0.0
  %357 = vmatmul.mubr.f32.gmra.mrb[0].mxu0 %v248
  %v358 = vpop.f32.mrb[0].mxu0
  %v359 = vadd.f32 0.0, %v358
  %v360 = vpop.f32.mrb[0].mxu0
  %361 = vmatprep.mubr.f32.mxu0 0.0
  %362 = vmatmul.mubr.f32.gmra.mrb[0].mxu0 %v249
  %v363 = vpop.f32.mrb[0].mxu0
  %v364 = vadd.f32 0.0, %v363
  %v365 = vpop.f32.mrb[0].mxu0
  %366 = vmatprep.mubr.f32.mxu0 0.0
  %367 = vmatmul.mubr.f32.gmra.mrb[0].mxu0 %v250
  %v368 = vpop.f32.mrb[0].mxu0
  %v369 = vadd.f32 0.0, %v368
  %v370 = vpop.f32.mrb[0].mxu0
  %371 = vmatprep.mubr.f32.mxu0 0.0
  %372 = vmatmul.mubr.f32.gmra.mrb[0].mxu0 %v251
  %v373 = vpop.f32.mrb[0].mxu0
  %v374 = vadd.f32 0.0, %v373
  %v375 = vpop.f32.mrb[0].mxu0
  %376 = vmatprep.mubr.f32.mxu0 0.0
  %377 = vmatmul.mubr.f32.gmra.mrb[0].mxu0 %v252
  %v378 = vpop.f32.mrb[0].mxu0
  %v379 = vadd.f32 0.0, %v378
  %v380 = vpop.f32.mrb[0].mxu0
  %381 = vmatprep.mubr.f32.mxu0 0.0
  %382 = vmatmul.mubr.f32.gmra.mrb[0].mxu0 %v253
  %v383 = vpop.f32.mrb[0].mxu0
  %v384 = vadd.f32 0.0, %v383
  %v385 = vpop.f32.mrb[0].mxu0
  %386 = vmatprep.mubr.f32.mxu0 0.0
  %387 = vmatmul.mubr.f32.gmra.mrb[0].mxu0 %v254
  %v388 = vpop.f32.mrb[0].mxu0
  %v389 = vadd.f32 0.0, %v388
  %v390 = vpop.f32.mrb[0].mxu0
  %391 = vmatprep.mubr.f32.mxu0 0.0
  %392 = vmatmul.mubr.f32.gmra.mrb[0].mxu0 %v255
  %v393 = vpop.f32.mrb[0].mxu0
  %v394 = vadd.f32 0.0, %v393
  %v395 = vpop.f32.mrb[0].mxu0
  %396 = vmatprep.mubr.f32.mxu0 0.0
  %397 = vmatmul.mubr.f32.gmra.mrb[0].mxu0 %v256
  %v398 = vpop.f32.mrb[0].mxu0
  %v399 = vadd.f32 0.0, %v398
  %v400 = vpop.f32.mrb[0].mxu0
  %401 = vdwg.mxu0
  %v402 = vmax.f32 %v324, 0.0
  %v403 = vmax.f32 %v329, 0.0
  %v404 = vmax.f32 %v334, 0.0
  %v405 = vmax.f32 %v339, 0.0
  %v406 = vmax.f32 %v344, 0.0
  %v407 = vmax.f32 %v349, 0.0
  %v408 = vmax.f32 %v354, 0.0
  %v409 = vmax.f32 %v359, 0.0
  %v410 = vmax.f32 %v364, 0.0
  %v411 = vmax.f32 %v369, 0.0
  %v412 = vmax.f32 %v374, 0.0
  %v413 = vmax.f32 %v379, 0.0
  %v414 = vmax.f32 %v384, 0.0
  %v415 = vmax.f32 %v389, 0.0
  %v416 = vmax.f32 %v394, 0.0
  %v417 = vmax.f32 %v399, 0.0
  %v418 = vld [vmem:[%s2 + $0x80] sm:$0x1]
  %419 = vmatprep.subr.mxu0 0.0
  %420 = vmatpush1.msra.mxu0 %v402
  %421 = vmatprep.subr.mxu0 0.0
  %422 = vmatpush1.msra.mxu0 %v403
  %423 = vmatprep.subr.mxu0 0.0
  %424 = vmatpush1.msra.mxu0 %v404
  %425 = vmatprep.subr.mxu0 0.0
  %426 = vmatpush1.msra.mxu0 %v405
  %427 = vmatprep.subr.mxu0 0.0
  %428 = vmatpush1.msra.mxu0 %v406
  %429 = vmatprep.subr.mxu0 0.0
  %430 = vmatpush1.msra.mxu0 %v407
  %431 = vmatprep.subr.mxu0 0.0
  %432 = vmatpush1.msra.mxu0 %v408
  %433 = vmatprep.subr.mxu0 0.0
  %434 = vmatpush1.msra.mxu0 %v409
  %435 = vmatprep.subr.mxu0 0.0
  %436 = vmatpush1.msra.mxu0 %v410
  %437 = vmatprep.subr.mxu0 0.0
  %438 = vmatpush1.msra.mxu0 %v411
  %439 = vmatprep.subr.mxu0 0.0
  %440 = vmatpush1.msra.mxu0 %v412
  %441 = vmatprep.subr.mxu0 0.0
  %442 = vmatpush1.msra.mxu0 %v413
  %443 = vmatprep.subr.mxu0 0.0
  %444 = vmatpush1.msra.mxu0 %v414
  %445 = vmatprep.subr.mxu0 0.0
  %446 = vmatpush1.msra.mxu0 %v415
  %447 = vmatprep.subr.mxu0 0.0
  %448 = vmatpush1.msra.mxu0 %v416
  %449 = vmatprep.subr.mxu0 0.0
  %450 = vmatpush1.msra.mxu0 %v417
  %451 = vmatprep.subr.mxu0 0.0
  %452 = vmatpush1.msra.mxu0 0.0
  %453 = vmatprep.subr.mxu0 0.0
  %454 = vmatpush1.msra.mxu0 0.0
  %455 = vmatprep.subr.mxu0 0.0
  %456 = vmatpush1.msra.mxu0 0.0
  %457 = vmatprep.subr.mxu0 0.0
  %458 = vmatpush1.msra.mxu0 0.0
  %459 = vmatprep.subr.mxu0 0.0
  %460 = vmatpush1.msra.mxu0 0.0
  %461 = vmatprep.subr.mxu0 0.0
  %462 = vmatpush1.msra.mxu0 0.0
  %463 = vmatprep.subr.mxu0 0.0
  %464 = vmatpush1.msra.mxu0 0.0
  %465 = vmatprep.subr.mxu0 0.0
  %466 = vmatpush1.msra.mxu0 0.0
  %467 = vmatprep.subr.mxu0 0.0
  %468 = vmatpush1.msra.mxu0 0.0
  %469 = vmatprep.subr.mxu0 0.0
  %470 = vmatpush1.msra.mxu0 0.0
  %471 = vmatprep.subr.mxu0 0.0
  %472 = vmatpush1.msra.mxu0 0.0
  %473 = vmatprep.subr.mxu0 0.0
  %474 = vmatpush1.msra.mxu0 0.0
  %475 = vmatprep.subr.mxu0 0.0
  %476 = vmatpush1.msra.mxu0 0.0
  %477 = vmatprep.subr.mxu0 0.0
  %478 = vmatpush1.msra.mxu0 0.0
  %479 = vmatprep.subr.mxu0 0.0
  %480 = vmatpush1.msra.mxu0 0.0
  %481 = vmatprep.subr.mxu0 0.0
  %482 = vmatpush1.msra.mxu0 0.0
  %483 = vmatprep.mubr.f32.mxu0 0.0
  %484 = vmatmul.mubr.f32.gmra.mrb[0].mxu0 %v418
  %v485 = vpop.f32.mrb[0].mxu0
  %v486 = vadd.f32 0.0, %v485
  %v487 = vpop.f32.mrb[0].mxu0
  %488 = vdwg.mxu0
  %489 = vst [vmem:[%s3] sm:$0x1] %v486
  // Predicated region
  $region14: #{qvalue_forward.1} parent=0 // pred_check
    _
  $region15: #{qvalue_forward.1} parent=0 // pred_check_branch
    %491 = sbr.rel (0) target = $region17
  $region16: #{qvalue_forward.1} parent=0 // pred_region
    _
  $region17: #{qvalue_forward.1} parent=0 // pred_fallthru
    _
  // Predicated region
  $region18: #{qvalue_forward.1} parent=0 // pred_check
    _
  $region19: #{qvalue_forward.1} parent=0 // pred_check_branch
    %493 = sbr.rel (0) target = $region21
  $region20: #{qvalue_forward.1} parent=0 // pred_region
    _
  $region21: #{qvalue_forward.1} parent=0 // pred_fallthru
    _

</llo_original>
